<compile_context>
chip_gen: v6e
topology: v6e:2x2x1
jax: 0.10.0
libtpu: 0.0.40
codegen_flags: <defaults>
</compile_context>

<pallas_src>
import math

import jax
import jax.numpy as jnp
from jax.experimental import pallas as pl
from jax.experimental.pallas import tpu as pltpu


def make_pe(channels: int, height: int, width: int) -> jnp.ndarray:
    """(C, H, W) positional-encoding buffer, identical to the PyTorch __init__
    triple loop (built once on host, like register_buffer)."""
    c = jnp.arange(channels)
    k_base = (c // 4) * 4                                          # group base k
    div = jnp.power(10000.0, k_base.astype(jnp.float32) / channels)
    i = jnp.arange(height, dtype=jnp.float32)
    j = jnp.arange(width, dtype=jnp.float32)

    pos_i = i[None, :, None] / div[:, None, None]                  # (C, H, 1)
    pos_j = j[None, None, :] / div[:, None, None]                  # (C, 1, W)

    sin_i = jnp.broadcast_to(jnp.sin(pos_i), (channels, height, width))
    cos_i = jnp.broadcast_to(jnp.cos(pos_i), (channels, height, width))
    sin_j = jnp.broadcast_to(jnp.sin(pos_j), (channels, height, width))
    cos_j = jnp.broadcast_to(jnp.cos(pos_j), (channels, height, width))

    rem = (c % 4)[:, None, None]
    pe = jnp.where(rem == 0, sin_i,
         jnp.where(rem == 1, cos_i,
         jnp.where(rem == 2, sin_j, cos_j)))
    return pe.astype(jnp.float32)


def prepare_pe(pe: jnp.ndarray, channels: int, height: int, width: int,
               dtype) -> jnp.ndarray:
    """Init-time (register_buffer-style) prep: slice to the forward shape, cast
    to the activation dtype and flatten lane-dense to (1, C*H*W).  Doing this
    once removes the per-call XLA slice/cast/copy ops from the hot path.
    Note: with this, the add happens in the activation dtype (for bf16 x this
    differs in the last bit from PyTorch's f32-buffer-add-then-cast)."""
    pe = pe[:channels, :height, :width].astype(dtype)
    return pe.reshape(1, channels * height * width)


def _add_pe_kernel(x_ref, pe_ref, o_ref):
    # x_ref: (bt, nt); pe_ref: (1, nt) -> cheap sublane broadcast across batch rows.
    o_ref[...] = (x_ref[...] + pe_ref[...]).astype(o_ref.dtype)


def _pick_tiles(B: int, N: int, dtype, block_bytes: int):
    """Largest lane-dense tiles keeping one x block under `block_bytes`.
    Sublane rounding is dtype-aware: 8 rows (f32), 16 (bf16/f16), 32 (int8/fp8),
    unless the block covers the full batch dim (equal-to-full-dim is always
    legal).  Lane dim is full N or a multiple of 128."""
    itemsize = jnp.dtype(dtype).itemsize
    sub = max(8, 32 // itemsize)                      # native sublane multiple
    target = max(128, block_bytes // itemsize)        # elements per x block

    nt = N if N <= target else max(128, (target // 128) * 128)
    if nt > N:
        nt = N

    rows = max(1, target // nt)
    if B <= rows:
        bt = B                                        # full batch dim: always legal
    else:
        bt = max(sub, (rows // sub) * sub)
        if bt >= B:
            bt = B
    return bt, nt, sub


def positional_encoding_2d(x: jnp.ndarray, pe2: jnp.ndarray,
                           *, block_bytes: int = 4 * 1024 * 1024,
                           force_pallas: bool = False) -> jnp.ndarray:
    """x: (B, C, H, W); pe2: (1, C*H*W) prepared at init time with prepare_pe().
    Returns x + pe broadcast over batch (the PyTorch forward)."""
    B, C, H, W = x.shape
    N = C * H * W
    assert pe2.shape == (1, N), f"pe2 shape {pe2.shape} != (1, {N})"
    assert pe2.dtype == x.dtype, "prepare_pe with the activation dtype at init"

    itemsize = jnp.dtype(x.dtype).itemsize
    x2 = x.reshape(B, N)   # lane-dense view; reshape stays outside pallas_call

    # Toy sizes (e.g. the 8x8 chess board): a fused XLA broadcast-add beats
    # kernel launch + per-step overhead.  The Pallas path pays off at
    # production sizes or when fused with adjacent work.
    if B * N * itemsize < (1 << 20) and not force_pallas:
        return (x2 + pe2).reshape(B, C, H, W)

    bt, nt, sub = _pick_tiles(B, N, x.dtype, block_bytes)
    # Batch innermost: pe's block index (0, n) is unchanged across consecutive
    # steps, so its tile stays VMEM-resident (no redundant pe re-DMA per batch
    # block).
    grid = (pl.cdiv(N, nt), pl.cdiv(B, bt))

    # VMEM budget derived from the tiles: double-buffered x + out + pe blocks
    # (pe's single row pads to `sub` sublanes) plus headroom; clamped so it
    # stays well under v7x's 64 MiB physical VMEM even if block_bytes is raised.
    vmem_bytes = 2 * (2 * bt * nt + sub * nt) * itemsize + (2 << 20)
    vmem_bytes = int(min(max(vmem_bytes, 16 << 20), 48 << 20))

    out2 = pl.pallas_call(
        _add_pe_kernel,
        out_shape=jax.ShapeDtypeStruct((B, N), x.dtype),
        grid=grid,
        in_specs=[
            pl.BlockSpec((bt, nt), lambda n, b: (b, n)),   # x tile
            pl.BlockSpec((1, nt), lambda n, b: (0, n)),    # pe tile (batch-invariant)
        ],
        out_specs=pl.BlockSpec((bt, nt), lambda n, b: (b, n)),
        compiler_params=pltpu.CompilerParams(
            # Both axes independent -> megacore-shardable.
            dimension_semantics=("parallel", "parallel"),
            vmem_limit_bytes=vmem_bytes,
        ),
    )(x2, pe2)
    return out2.reshape(B, C, H, W)


if __name__ == "__main__":
    # Chess-board geometry (module default H=W=8), small channel count.
    B, C, H, W = 4, 32, 8, 8
    key = jax.random.PRNGKey(0)
    x = jax.random.normal(key, (B, C, H, W), dtype=jnp.float32)

    pe = make_pe(C, H, W)                          # __init__: build buffer once
    pe2 = prepare_pe(pe, C, H, W, x.dtype)         # init-time hoist (register_buffer-style)

    # Exercise the actual Pallas kernel even at this toy size.
    out = positional_encoding_2d(x, pe2, force_pallas=True)
    out = jax.block_until_ready(out)

    # Reference: plain JAX broadcast-add of the same PE buffer.
    ref = x + pe[None]
    assert out.shape == (B, C, H, W)
    assert jnp.allclose(out, ref, atol=1e-6), "pallas path mismatch vs reference"

    # The size-based fallback path must match as well.
    out_fb = jax.block_until_ready(positional_encoding_2d(x, pe2))
    assert jnp.allclose(out_fb, ref, atol=1e-6), "fallback path mismatch vs reference"

    # Spot-check PE entries against the literal PyTorch formula.
    assert abs(float(pe[0, 3, 5]) - math.sin(3 / 10000 ** (0 / C))) < 1e-5
    assert abs(float(pe[1, 3, 5]) - math.cos(3 / 10000 ** (0 / C))) < 1e-5
    assert abs(float(pe[2, 3, 5]) - math.sin(5 / 10000 ** (0 / C))) < 1e-5
    assert abs(float(pe[3, 3, 5]) - math.cos(5 / 10000 ** (0 / C))) < 1e-5
    assert abs(float(pe[4, 3, 5]) - math.sin(3 / 10000 ** (4 / C))) < 1e-5
    assert abs(float(pe[7, 3, 5]) - math.cos(5 / 10000 ** (4 / C))) < 1e-5

    print("KERNEL_OK")
</pallas_src>

<mosaic_0001>
module attributes {stable_mosaic.version = 11 : i64} {
  func.func @_add_pe_kernel(%arg0: i32, %arg1: i32, %arg2: memref<4x2048xf32, #tpu.memory_space<vmem>>, %arg3: memref<1x2048xf32, #tpu.memory_space<vmem>>, %arg4: memref<4x2048xf32, #tpu.memory_space<vmem>>) attributes {dimension_semantics = [#tpu.dimension_semantics<parallel>, #tpu.dimension_semantics<parallel>], iteration_bounds = array<i64: 1, 1>, scalar_prefetch = 0 : i64, scratch_operands = 0 : i64, tpu.core_type = #tpu.core_type<tc>, window_params = [{transform_indices = @transform_0, window_bounds = array<i64: 4, 2048>}, {transform_indices = @transform_1, window_bounds = array<i64: 1, 2048>}, {transform_indices = @transform_2, window_bounds = array<i64: 4, 2048>}]} {
    %c0 = arith.constant 0 : index
    %c0_0 = arith.constant 0 : index
    %0 = vector.load %arg2[%c0, %c0_0] : memref<4x2048xf32, #tpu.memory_space<vmem>>, vector<4x2048xf32>
    %c0_1 = arith.constant 0 : index
    %c0_2 = arith.constant 0 : index
    %1 = vector.load %arg3[%c0_1, %c0_2] : memref<1x2048xf32, #tpu.memory_space<vmem>>, vector<1x2048xf32>
    %2 = vector.broadcast %1 : vector<1x2048xf32> to vector<4x2048xf32>
    %3 = arith.addf %0, %2 : vector<4x2048xf32>
    %c0_3 = arith.constant 0 : index
    %c0_4 = arith.constant 0 : index
    %4 = vector.load %arg4[%c0_3, %c0_4] : memref<4x2048xf32, #tpu.memory_space<vmem>>, vector<4x2048xf32>
    tpu.vector_store %arg4[%c0_3, %c0_4], %3 {strides = array<i32>} : memref<4x2048xf32, #tpu.memory_space<vmem>>, vector<4x2048xf32>,
    return
  }
  func.func @transform_0(%arg0: i32, %arg1: i32) -> (i32, i32) {
    %c0_i32 = arith.constant 0 : i32
    return %arg1, %arg0 : i32, i32
  }
  func.func @transform_1(%arg0: i32, %arg1: i32) -> (i32, i32) {
    %c0_i32 = arith.constant 0 : i32
    %c0_i32_0 = arith.constant 0 : i32
    return %c0_i32, %arg0 : i32, i32
  }
  func.func @transform_2(%arg0: i32, %arg1: i32) -> (i32, i32) {
    %c0_i32 = arith.constant 0 : i32
    return %arg1, %arg0 : i32, i32
  }
}

</mosaic_0001>

<llo_original>
// kernel: tpu_custom_call.1
$region0: #{tpu_custom_call.1}
  #allocation0 [shape = 'u32[]', space=smem, size = 0x4, offset = 0x4, fixed_abs, tag = 'smem constant byte address 0x4 - core index']
  #allocation1 [shape = 'u32[144,128]{1,0:T(1,128)}', space=vmem, size = 0x12000, scoped, tag = 'internal scratch']
  %s0 = inlined_call_operand.hbm [shape: f32[4,2048], index: 0, kind: input, shape index: {}]
  %s1 = inlined_call_operand.hbm [shape: f32[1,2048], index: 1, kind: input, shape index: {}]
  %s2 = inlined_call_operand.hbm [shape: f32[4,2048], index: 2, kind: output, shape index: {}]
  %s3 = sld [smem:[#allocation0]]
  $region26: #{tpu_custom_call.1} parent=0
    _
  %s5 = ssub.s32 1, %s3
  %s6 = scalar_select 0, %s5, %s3
  $region1: #{tpu_custom_call.1} parent=0
    #allocation2 [shape = 'u8[32768]{0}', space=vmem, size = 0x8000, scoped, tag = 'input window, operand 0, single buffered']
    #allocation3 [shape = 's32[1]{0}', space=sflag, size = 0x4, scoped, tag = 'scoped memory for tpu_custom_call.1']
    #allocation4 [shape = 's32[1]{0}', space=sflag, size = 0x4, scoped, tag = 'scoped memory for tpu_custom_call.1']
    #allocation5 [shape = 'u8[8192]{0}', space=vmem, size = 0x2000, scoped, tag = 'input window, operand 1, single buffered']
    #allocation6 [shape = 's32[1]{0}', space=sflag, size = 0x4, scoped, tag = 'scoped memory for tpu_custom_call.1']
    #allocation7 [shape = 'u8[32768]{0}', space=vmem, size = 0x8000, scoped, tag = 'output window, operand 0, single buffered']
    %7 = vsyncpa [#allocation3], 0
    %8 = vsyncpa [#allocation6], 0
    %9 = vsyncpa [#allocation4], 0
    // Predicated region
    $region2: #{tpu_custom_call.1} parent=1 // pred_check
      _
    $region3: #{tpu_custom_call.1} parent=1 // pred_check_branch
      %11 = sbr.rel (0) target = $region5
    $region4: #{tpu_custom_call.1} parent=1 // pred_region
      %s13 = ssub.s32 1024, 1024
      %14 = vsyncadd [#allocation3], %s13
      %s16 = sshll.u32 [#allocation2], 4
      %s17 = int_to_ptr.vmem [resolvable:$true] %s16
      %19 = dma.hbm_to_vmem [thread:$0]  %s0, 1024, %s17, [#allocation3]
    $region5: #{tpu_custom_call.1} parent=1 // pred_fallthru
      _
    // Predicated region
    $region6: #{tpu_custom_call.1} parent=1 // pred_check
      _
    $region7: #{tpu_custom_call.1} parent=1 // pred_check_branch
      %21 = sbr.rel (0) target = $region9
    $region8: #{tpu_custom_call.1} parent=1 // pred_region
      %s23 = ssub.s32 256, 256
      %24 = vsyncadd [#allocation6], %s23
      %s26 = sshll.u32 [#allocation5], 4
      %s27 = int_to_ptr.vmem [resolvable:$true] %s26
      %29 = dma.hbm_to_vmem [thread:$0]  %s1, 256, %s27, [#allocation6]
    $region9: #{tpu_custom_call.1} parent=1 // pred_fallthru
      _
    // Predicated region
    $region10: #{tpu_custom_call.1} parent=1 // pred_check
      _
    $region11: #{tpu_custom_call.1} parent=1 // pred_check_branch
      %31 = sbr.rel (0) target = $region13
    $region12: #{tpu_custom_call.1} parent=1 // pred_region
      %32 = dma.done [#allocation3], 1024
    $region13: #{tpu_custom_call.1} parent=1 // pred_fallthru
      _
    // Predicated region
    $region14: #{tpu_custom_call.1} parent=1 // pred_check
      _
    $region15: #{tpu_custom_call.1} parent=1 // pred_check_branch
      %34 = sbr.rel (0) target = $region17
    $region16: #{tpu_custom_call.1} parent=1 // pred_region
      %35 = dma.done [#allocation6], 256
    $region17: #{tpu_custom_call.1} parent=1 // pred_fallthru
      _
    %v36 = vld [vmem:[#allocation2] sm:$0xff]
    %v37 = vld [vmem:[#allocation2 + $0x8] sm:$0xff]
    %v38 = vld [vmem:[#allocation2 + $0x10] sm:$0xff]
    %v39 = vld [vmem:[#allocation2 + $0x18] sm:$0xff]
    %v40 = vld [vmem:[#allocation2 + $0x20] sm:$0xff]
    %v41 = vld [vmem:[#allocation2 + $0x28] sm:$0xff]
    %v42 = vld [vmem:[#allocation2 + $0x30] sm:$0xff]
    %v43 = vld [vmem:[#allocation2 + $0x38] sm:$0xff]
    %v44 = vld [vmem:[#allocation5] sm:$0xff]
    %v45 = vld [vmem:[#allocation5 + $0x8] sm:$0xff]
    %v48 = vlaneseq
    %v49 = vshrl.u32 %v48, 7
    %v50 = vsub.s32 0, %v49
    %v51 = vrot.slane %v44, %v50
    %v52 = vlaneseq
    %v53 = vshrl.u32 %v52, 7
    %v54 = vsub.s32 1, %v53
    %v55 = vrot.slane %v44, %v54
    %v56 = vlaneseq
    %v57 = vshrl.u32 %v56, 7
    %v58 = vsub.s32 2, %v57
    %v59 = vrot.slane %v44, %v58
    %v60 = vlaneseq
    %v61 = vshrl.u32 %v60, 7
    %v62 = vsub.s32 3, %v61
    %v63 = vrot.slane %v44, %v62
    %v64 = vlaneseq
    %v65 = vshrl.u32 %v64, 7
    %v66 = vsub.s32 4, %v65
    %v67 = vrot.slane %v44, %v66
    %v68 = vlaneseq
    %v69 = vshrl.u32 %v68, 7
    %v70 = vsub.s32 5, %v69
    %v71 = vrot.slane %v44, %v70
    %v72 = vlaneseq
    %v73 = vshrl.u32 %v72, 7
    %v74 = vsub.s32 6, %v73
    %v75 = vrot.slane %v44, %v74
    %v76 = vlaneseq
    %v77 = vshrl.u32 %v76, 7
    %v78 = vsub.s32 7, %v77
    %v79 = vrot.slane %v44, %v78
    %v80 = vlaneseq
    %v81 = vshrl.u32 %v80, 7
    %v82 = vsub.s32 0, %v81
    %v83 = vrot.slane %v45, %v82
    %v84 = vlaneseq
    %v85 = vshrl.u32 %v84, 7
    %v86 = vsub.s32 1, %v85
    %v87 = vrot.slane %v45, %v86
    %v88 = vlaneseq
    %v89 = vshrl.u32 %v88, 7
    %v90 = vsub.s32 2, %v89
    %v91 = vrot.slane %v45, %v90
    %v92 = vlaneseq
    %v93 = vshrl.u32 %v92, 7
    %v94 = vsub.s32 3, %v93
    %v95 = vrot.slane %v45, %v94
    %v96 = vlaneseq
    %v97 = vshrl.u32 %v96, 7
    %v98 = vsub.s32 4, %v97
    %v99 = vrot.slane %v45, %v98
    %v100 = vlaneseq
    %v101 = vshrl.u32 %v100, 7
    %v102 = vsub.s32 5, %v101
    %v103 = vrot.slane %v45, %v102
    %v104 = vlaneseq
    %v105 = vshrl.u32 %v104, 7
    %v106 = vsub.s32 6, %v105
    %v107 = vrot.slane %v45, %v106
    %v108 = vlaneseq
    %v109 = vshrl.u32 %v108, 7
    %v110 = vsub.s32 7, %v109
    %v111 = vrot.slane %v45, %v110
    %v112 = vcombine.low %v51, %v55
    %v113 = vcombine.low %v59, %v63
    %v114 = vcombine.low %v67, %v71
    %v115 = vcombine.low %v75, %v79
    %v116 = vcombine.low %v83, %v87
    %v117 = vcombine.low %v91, %v95
    %v118 = vcombine.low %v99, %v103
    %v119 = vcombine.low %v107, %v111
    %v128 = vadd.f32 %v36, %v112
    %v129 = vadd.f32 %v37, %v113
    %v130 = vadd.f32 %v38, %v114
    %v131 = vadd.f32 %v39, %v115
    %v132 = vadd.f32 %v40, %v116
    %v133 = vadd.f32 %v41, %v117
    %v134 = vadd.f32 %v42, %v118
    %v135 = vadd.f32 %v43, %v119
    %136 = vst [vmem:[#allocation7] sm:$0xff] %v128
    %137 = vst [vmem:[#allocation7 + $0x8] sm:$0xff] %v129
    %138 = vst [vmem:[#allocation7 + $0x10] sm:$0xff] %v130
    %139 = vst [vmem:[#allocation7 + $0x18] sm:$0xff] %v131
    %140 = vst [vmem:[#allocation7 + $0x20] sm:$0xff] %v132
    %141 = vst [vmem:[#allocation7 + $0x28] sm:$0xff] %v133
    %142 = vst [vmem:[#allocation7 + $0x30] sm:$0xff] %v134
    %143 = vst [vmem:[#allocation7 + $0x38] sm:$0xff] %v135
    // Predicated region
    $region18: #{tpu_custom_call.1} parent=1 // pred_check
      _
    $region19: #{tpu_custom_call.1} parent=1 // pred_check_branch
      %145 = sbr.rel (0) target = $region21
    $region20: #{tpu_custom_call.1} parent=1 // pred_region
      %s147 = ssub.s32 1024, 1024
      %148 = vsyncadd [#allocation4], %s147
      %s150 = sshll.u32 [#allocation7], 4
      %s151 = int_to_ptr.vmem [resolvable:$true] %s150
      %153 = dma.vmem_to_hbm [thread:$0]  %s151, 1024, %s2, [#allocation4]
    $region21: #{tpu_custom_call.1} parent=1 // pred_fallthru
      _
    // Predicated region
    $region22: #{tpu_custom_call.1} parent=1 // pred_check
      _
    $region23: #{tpu_custom_call.1} parent=1 // pred_check_branch
      %155 = sbr.rel (0) target = $region25
    $region24: #{tpu_custom_call.1} parent=1 // pred_region
      %156 = dma.done [#allocation4], 1024
    $region25: #{tpu_custom_call.1} parent=1 // pred_fallthru
      _
    %157 = vsyncpa [#allocation3], 1
    %158 = vsyncpa [#allocation6], 1
    %159 = vsyncpa [#allocation4], 1

</llo_original>
